<compile_context>
chip_gen: v7x
topology: tpu7x:2x2x1
jax: 0.10.0
libtpu: 0.0.40
codegen_flags: <defaults>
</compile_context>

<pallas_src>
import jax
import jax.numpy as jnp
from jax.experimental import pallas as pl
from jax.experimental.pallas import tpu as pltpu


def dqnn_kernel(xp_ref, w1p_ref, w2p_ref, b1p_ref, b2p_ref, o_ref):
    # xp_ref : (RB, 128)   f32   G batch rows per sublane-row, features on lanes
    # w1p_ref: (128, G*H)  bf16  kron(I_G, w1)   -- VMEM resident
    # w2p_ref: (G*H, G*A)  bf16  kron(I_G, w2)   -- VMEM resident
    # b1p_ref: (1, G*H)    f32   tile(b1, G)     -- VMEM resident
    # b2p_ref: (1, G*A)    f32   tile(b2, G)     -- VMEM resident
    # o_ref  : (RB, G*A)   f32   G batch rows x A actions per sublane-row
    x = xp_ref[...].astype(jnp.bfloat16)                       # free VPU cast in-kernel
    # Layer 1 on the MXU (bf16 operands, f32 accumulate); bias + ReLU in f32 (VPU).
    h = jnp.dot(x, w1p_ref[...], preferred_element_type=jnp.float32)       # (RB, G*H)
    h = jnp.maximum(h + b1p_ref[...], 0.0)
    # Layer 2 also on the (otherwise idle) MXU; single full-tile store.
    y = jnp.dot(h.astype(jnp.bfloat16), w2p_ref[...],
                preferred_element_type=jnp.float32)                        # (RB, G*A)
    o_ref[...] = (y + b2p_ref[...]).astype(o_ref.dtype)


def _round_up(n, m):
    return ((n + m - 1) // m) * m


def dqnn_forward(x, w1, b1, w2, b2, *, tb_max=65536):
    """Forward pass of DQNN.

    x : (B, S) float32, w1: (S, H), b1: (H,), w2: (H, A), b2: (A,)
    returns (B, A) float32.
    """
    B, S = x.shape
    H = w1.shape[1]
    A = w2.shape[1]
    if 128 % S != 0:
        # TODO(synk): pad the feature axis up to a divisor of 128 for general state_dim.
        raise NotImplementedError("state_dim must divide 128 for the packed layout")
    G = 128 // S                                   # batch rows packed per 128-lane row

    # Pad the batch only if B is not a multiple of G (a multiple-of-G batch is copy-free).
    Bp = _round_up(B, G)
    xq = x if Bp == B else jnp.pad(x, ((0, Bp - B), (0, 0)))
    Rp = Bp // G
    xp = xq.reshape(Rp, G * S)                     # bit-identical layout -> free reshape

    # Packed block-diagonal weights / tiled biases (tiny; resident in VMEM).
    w1p = jnp.kron(jnp.eye(G, dtype=w1.dtype), w1).astype(jnp.bfloat16)    # (128, G*H)
    w2p = jnp.kron(jnp.eye(G, dtype=w2.dtype), w2).astype(jnp.bfloat16)    # (G*H, G*A)
    b1p = jnp.tile(b1.astype(jnp.float32), G).reshape(1, G * H)
    b2p = jnp.tile(b2.astype(jnp.float32), G).reshape(1, G * A)

    # Batch tile: RB packed rows (= RB*G batch rows), multiple of 8 sublanes, capped at
    # 2048 (~13 MiB of VMEM incl. double buffers + f32 hidden temp).  Keep >=2 grid
    # steps when the batch allows so both v7x TensorCores get work.
    rb_cap = min(2048, max(8, _round_up(max(tb_max, 256) // G, 8)))
    if Rp <= 8:
        rb = Rp                                    # tiny batch: one full-dim block
    else:
        rb = min(rb_cap, _round_up(pl.cdiv(Rp, 2), 8))
    grid = (pl.cdiv(Rp, rb),)                      # partial last block is masked by Pallas

    yp = pl.pallas_call(
        dqnn_kernel,
        out_shape=jax.ShapeDtypeStruct((Rp, G * A), jnp.float32),
        grid_spec=pltpu.PrefetchScalarGridSpec(
            num_scalar_prefetch=0,
            grid=grid,
            in_specs=[
                pl.BlockSpec((rb, G * S), lambda i: (i, 0)),      # x streams per step
                pl.BlockSpec((G * S, G * H), lambda i: (0, 0)),   # packed w1 resident
                pl.BlockSpec((G * H, G * A), lambda i: (0, 0)),   # packed w2 resident
                pl.BlockSpec((1, G * H), lambda i: (0, 0)),       # packed b1 resident
                pl.BlockSpec((1, G * A), lambda i: (0, 0)),       # packed b2 resident
            ],
            out_specs=pl.BlockSpec((rb, G * A), lambda i: (i, 0)),
        ),
        compiler_params=pltpu.CompilerParams(
            # batch-tile axis is independent -> shard across TensorCores on v7x.
            # (If profiling shows it does not split, switch to pltpu.CORE_PARALLEL.)
            dimension_semantics=("parallel",),
            vmem_limit_bytes=32 * 1024 * 1024),
    )(xp, w1p, w2p, b1p, b2p)

    y = yp.reshape(Bp, A)                          # free reshape back to (B, A) row-major
    return y if Bp == B else y[:B]


def init_params(key, state_dim, action_dim, hidden=16):
    # Deterministic init mimicking torch.nn.Linear default:
    # U(-1/sqrt(fan_in), 1/sqrt(fan_in)) for both weight and bias.
    k1, k2, k3, k4 = jax.random.split(key, 4)
    bound1 = 1.0 / jnp.sqrt(jnp.float32(state_dim))
    bound2 = 1.0 / jnp.sqrt(jnp.float32(hidden))
    w1 = jax.random.uniform(k1, (state_dim, hidden), jnp.float32, -bound1, bound1)
    b1 = jax.random.uniform(k2, (hidden,), jnp.float32, -bound1, bound1)
    w2 = jax.random.uniform(k3, (hidden, action_dim), jnp.float32, -bound2, bound2)
    b2 = jax.random.uniform(k4, (action_dim,), jnp.float32, -bound2, bound2)
    return w1, b1, w2, b2


def dqnn_reference(x, w1, b1, w2, b2):
    # Mirrors the kernel's bf16-operand / f32-accumulate MXU numerics for both layers.
    # TODO(synk): exact f32 torch parity would need f32 MXU passes (Q-values differ ~1e-2).
    h = jnp.dot(x.astype(jnp.bfloat16), w1.astype(jnp.bfloat16),
                preferred_element_type=jnp.float32) + b1[None, :]
    h = jnp.maximum(h, 0.0)
    return jnp.dot(h.astype(jnp.bfloat16), w2.astype(jnp.bfloat16),
                   preferred_element_type=jnp.float32) + b2[None, :]


if __name__ == "__main__":
    key = jax.random.PRNGKey(0)
    kx, kp = jax.random.split(key)

    batch, state_dim, action_dim = 8, 4, 2
    x = jax.random.normal(kx, (batch, state_dim), dtype=jnp.float32)
    w1, b1, w2, b2 = init_params(kp, state_dim, action_dim)

    fwd = jax.jit(dqnn_forward, static_argnames=("tb_max",))

    out = jax.block_until_ready(fwd(x, w1, b1, w2, b2))
    ref = dqnn_reference(x, w1, b1, w2, b2)
    assert out.shape == (batch, action_dim)
    assert jnp.allclose(out, ref, atol=5e-3, rtol=5e-3)

    # Exercise a multi-step pipelined grid with a partial last block and B % 32 != 0.
    x2 = jax.random.normal(kx, (300, state_dim), dtype=jnp.float32)
    out2 = jax.block_until_ready(fwd(x2, w1, b1, w2, b2, tb_max=128))
    ref2 = dqnn_reference(x2, w1, b1, w2, b2)
    assert out2.shape == (300, action_dim)
    assert jnp.allclose(out2, ref2, atol=5e-3, rtol=5e-3)

    print("KERNEL_OK")
</pallas_src>

<mosaic_0001>
module attributes {stable_mosaic.version = 11 : i64} {
  func.func @dqnn_kernel(%arg0: i32, %arg1: memref<1x128xf32, #tpu.memory_space<vmem>>, %arg2: memref<128x512xbf16, #tpu.memory_space<vmem>>, %arg3: memref<512x64xbf16, #tpu.memory_space<vmem>>, %arg4: memref<1x512xf32, #tpu.memory_space<vmem>>, %arg5: memref<1x64xf32, #tpu.memory_space<vmem>>, %arg6: memref<1x64xf32, #tpu.memory_space<vmem>>) attributes {dimension_semantics = [#tpu.dimension_semantics<parallel>], iteration_bounds = array<i64: 1>, scalar_prefetch = 0 : i64, scratch_operands = 0 : i64, tpu.core_type = #tpu.core_type<tc>, window_params = [{transform_indices = @transform_0, window_bounds = array<i64: 1, 128>}, {pipeline_mode = #tpu.pipeline_mode<synchronous>, transform_indices = @transform_1, window_bounds = array<i64: 128, 512>}, {pipeline_mode = #tpu.pipeline_mode<synchronous>, transform_indices = @transform_2, window_bounds = array<i64: 512, 64>}, {pipeline_mode = #tpu.pipeline_mode<synchronous>, transform_indices = @transform_3, window_bounds = array<i64: 1, 512>}, {pipeline_mode = #tpu.pipeline_mode<synchronous>, transform_indices = @transform_4, window_bounds = array<i64: 1, 64>}, {transform_indices = @transform_5, window_bounds = array<i64: 1, 64>}]} {
    %c0 = arith.constant 0 : index
    %c0_0 = arith.constant 0 : index
    %0 = vector.load %arg1[%c0, %c0_0] : memref<1x128xf32, #tpu.memory_space<vmem>>, vector<1x128xf32>
    %1 = arith.truncf %0 : vector<1x128xf32> to vector<1x128xbf16>
    %c0_1 = arith.constant 0 : index
    %c0_2 = arith.constant 0 : index
    %2 = vector.load %arg2[%c0_1, %c0_2] : memref<128x512xbf16, #tpu.memory_space<vmem>>, vector<128x512xbf16>
    %cst = arith.constant dense<0.000000e+00> : vector<1x512xf32>
    %3 = tpu.matmul %1, %2, %cst {dimension_numbers = #tpu.dot_dimension_numbers<[1], [0], [0], [1], [0, 0, 1, 1], [], []>} : vector<1x128xbf16>, vector<128x512xbf16>, vector<1x512xf32> -> vector<1x512xf32>
    %c0_3 = arith.constant 0 : index
    %c0_4 = arith.constant 0 : index
    %4 = vector.load %arg4[%c0_3, %c0_4] : memref<1x512xf32, #tpu.memory_space<vmem>>, vector<1x512xf32>
    %5 = arith.addf %3, %4 : vector<1x512xf32>
    %cst_5 = arith.constant 0.000000e+00 : f32
    %6 = vector.broadcast %cst_5 : f32 to vector<1x512xf32>
    %7 = arith.maximumf %5, %6 : vector<1x512xf32>
    %8 = arith.truncf %7 : vector<1x512xf32> to vector<1x512xbf16>
    %c0_6 = arith.constant 0 : index
    %c0_7 = arith.constant 0 : index
    %9 = vector.load %arg3[%c0_6, %c0_7] : memref<512x64xbf16, #tpu.memory_space<vmem>>, vector<512x64xbf16>
    %cst_8 = arith.constant dense<0.000000e+00> : vector<1x64xf32>
    %10 = tpu.matmul %8, %9, %cst_8 {dimension_numbers = #tpu.dot_dimension_numbers<[1], [0], [0], [1], [0, 0, 1, 1], [], []>} : vector<1x512xbf16>, vector<512x64xbf16>, vector<1x64xf32> -> vector<1x64xf32>
    %c0_9 = arith.constant 0 : index
    %c0_10 = arith.constant 0 : index
    %11 = vector.load %arg5[%c0_9, %c0_10] : memref<1x64xf32, #tpu.memory_space<vmem>>, vector<1x64xf32>
    %12 = arith.addf %10, %11 : vector<1x64xf32>
    %c0_11 = arith.constant 0 : index
    %c0_12 = arith.constant 0 : index
    %13 = vector.load %arg6[%c0_11, %c0_12] : memref<1x64xf32, #tpu.memory_space<vmem>>, vector<1x64xf32>
    tpu.vector_store %arg6[%c0_11, %c0_12], %12 {strides = array<i32>} : memref<1x64xf32, #tpu.memory_space<vmem>>, vector<1x64xf32>,
    return
  }
  func.func @transform_0(%arg0: i32) -> (i32, i32) {
    %c0_i32 = arith.constant 0 : i32
    %c0_i32_0 = arith.constant 0 : i32
    return %arg0, %c0_i32 : i32, i32
  }
  func.func @transform_1(%arg0: i32) -> (i32, i32) {
    %c0_i32 = arith.constant 0 : i32
    %c0_i32_0 = arith.constant 0 : i32
    %c0_i32_1 = arith.constant 0 : i32
    return %c0_i32, %c0_i32_0 : i32, i32
  }
  func.func @transform_2(%arg0: i32) -> (i32, i32) {
    %c0_i32 = arith.constant 0 : i32
    %c0_i32_0 = arith.constant 0 : i32
    %c0_i32_1 = arith.constant 0 : i32
    return %c0_i32, %c0_i32_0 : i32, i32
  }
  func.func @transform_3(%arg0: i32) -> (i32, i32) {
    %c0_i32 = arith.constant 0 : i32
    %c0_i32_0 = arith.constant 0 : i32
    %c0_i32_1 = arith.constant 0 : i32
    return %c0_i32, %c0_i32_0 : i32, i32
  }
  func.func @transform_4(%arg0: i32) -> (i32, i32) {
    %c0_i32 = arith.constant 0 : i32
    %c0_i32_0 = arith.constant 0 : i32
    %c0_i32_1 = arith.constant 0 : i32
    return %c0_i32, %c0_i32_0 : i32, i32
  }
  func.func @transform_5(%arg0: i32) -> (i32, i32) {
    %c0_i32 = arith.constant 0 : i32
    %c0_i32_0 = arith.constant 0 : i32
    return %arg0, %c0_i32 : i32, i32
  }
}

</mosaic_0001>

<llo_original>
// kernel: tile.13
$region0: #{tile.13}
  #allocation0 [shape = 's32[1]{0}', space=sflag, size = 0x4, scoped, tag = 'scoped memory for tile.13']
  %s0 = inlined_call_operand.vmem [shape: f32[16], index: 0, kind: input, shape index: {}]
  %s1 = inlined_call_operand.vmem [shape: f32[32,16], index: 1, kind: output, shape index: {}]
  // Predicated region
  $region2: #{tile.13} parent=0 // pred_check
    _
  $region3: #{tile.13} parent=0 // pred_check_branch
    %3 = sbr.rel (0) target = $region5
  $region4: #{tile.13} parent=0 // pred_region
    _
  $region5: #{tile.13} parent=0 // pred_fallthru
    _
  %v4 = vld [vmem:[%s0] ss:$0 sm:$0xff]
  %5 = vst [vmem:[%s1] sm:$0xff] %v4
  %s6 = scalar_lea.vmem %s1, 8
  %7 = vst [vmem:[%s6] sm:$0xff] %v4
  %s8 = scalar_lea.vmem %s1, 16
  %9 = vst [vmem:[%s8] sm:$0xff] %v4
  %s10 = scalar_lea.vmem %s1, 24
  %11 = vst [vmem:[%s10] sm:$0xff] %v4

// kernel: tile.14
$region0: #{tile.14}
  %s0 = inlined_call_operand.vmem [shape: f32[32,16], index: 0, kind: input, shape index: {}]
  %s1 = inlined_call_operand.vmem [shape: f32[1,512], index: 1, kind: output, shape index: {}]
  $region1: #{tile.14} parent=0
    #allocation0 [shape = 'u8[16384]{0}', space=vmem, size = 0x4000, scoped, tag = 'scoped mem for output reshape']
    %v2 = vld [vmem:[%s0] ss:$8 sm:$0xf]
    %vm3 = vcmask 130048
    %4 = vst.msk [vmem:[#allocation0] ss:$8 sm:$0xf] %vm3, %v2
    %s5 = scalar_lea.vmem %s0, 7
    %v6 = vld [vmem:[%s5] ss:$8 sm:$0xf]
    %7 = vrot.lane.b32.xlu0 %v6, 112
    %v8 = vpop.permute.xlu0 %7
    %vm9 = vcmask 1048448
    %10 = vst.msk [vmem:[#allocation0] ss:$8 sm:$0xf] %vm9, %v8
    %s11 = scalar_lea.vmem %s0, 6
    %v12 = vld [vmem:[%s11] ss:$8 sm:$0xf]
    %13 = vrot.lane.b32.xlu0 %v12, 96
    %v14 = vpop.permute.xlu0 %13
    %vm15 = vcmask 917248
    %16 = vst.msk [vmem:[#allocation0] ss:$8 sm:$0xf] %vm15, %v14
    %s17 = scalar_lea.vmem %s0, 5
    %v18 = vld [vmem:[%s17] ss:$8 sm:$0xf]
    %19 = vrot.lane.b32.xlu0 %v18, 80
    %v20 = vpop.permute.xlu0 %19
    %vm21 = vcmask 786048
    %22 = vst.msk [vmem:[#allocation0] ss:$8 sm:$0xf] %vm21, %v20
    %s23 = scalar_lea.vmem %s0, 4
    %v24 = vld [vmem:[%s23] ss:$8 sm:$0xf]
    %25 = vrot.lane.b32.xlu0 %v24, 64
    %v26 = vpop.permute.xlu0 %25
    %vm27 = vcmask 654848
    %28 = vst.msk [vmem:[#allocation0] ss:$8 sm:$0xf] %vm27, %v26
    %s29 = scalar_lea.vmem %s0, 3
    %v30 = vld [vmem:[%s29] ss:$8 sm:$0xf]
    %31 = vrot.lane.b32.xlu0 %v30, 48
    %v32 = vpop.permute.xlu0 %31
    %vm33 = vcmask 523648
    %34 = vst.msk [vmem:[#allocation0] ss:$8 sm:$0xf] %vm33, %v32
    %s35 = scalar_lea.vmem %s0, 2
    %v36 = vld [vmem:[%s35] ss:$8 sm:$0xf]
    %37 = vrot.lane.b32.xlu0 %v36, 32
    %v38 = vpop.permute.xlu0 %37
    %vm39 = vcmask 392448
    %40 = vst.msk [vmem:[#allocation0] ss:$8 sm:$0xf] %vm39, %v38
    %s41 = scalar_lea.vmem %s0, 1
    %v42 = vld [vmem:[%s41] ss:$8 sm:$0xf]
    %43 = vrot.lane.b32.xlu0 %v42, 16
    %v44 = vpop.permute.xlu0 %43
    %vm45 = vcmask 261248
    %46 = vst.msk [vmem:[#allocation0] ss:$8 sm:$0xf] %vm45, %v44
    %s48 = sshllo.u32 0, 1
    %v50 = vld [vmem:[#allocation0] sm:%s48]
    %s51 = sshllo.u32 0, 1
    %52 = vst [vmem:[%s1] sm:%s51] %v50
    %s53 = scalar_lea.vmem [#allocation0], 8
    %v54 = vld [vmem:[%s53] sm:%s48]
    %s55 = sshllo.u32 0, 1
    %s56 = scalar_lea.vmem %s1, 1
    %57 = vst [vmem:[%s56] sm:%s55] %v54
    %s58 = scalar_lea.vmem [#allocation0], 16
    %v59 = vld [vmem:[%s58] sm:%s48]
    %s60 = sshllo.u32 0, 1
    %s61 = smul.addr 1, 2
    %s62 = scalar_lea.vmem %s1, %s61
    %63 = vst [vmem:[%s62] sm:%s60] %v59
    %s64 = scalar_lea.vmem [#allocation0], 24
    %v65 = vld [vmem:[%s64] sm:%s48]
    %s66 = sshllo.u32 0, 1
    %s67 = smul.addr 1, 3
    %s68 = scalar_lea.vmem %s1, %s67
    %69 = vst [vmem:[%s68] sm:%s66] %v65

// kernel: tile.18
$region0: #{tile.18}
  #allocation0 [shape = 's32[1]{0}', space=sflag, size = 0x4, scoped, tag = 'scoped memory for tile.18']
  %s0 = inlined_call_operand.vmem [shape: f32[2], index: 0, kind: input, shape index: {}]
  %s1 = inlined_call_operand.vmem [shape: f32[32,2], index: 1, kind: output, shape index: {}]
  // Predicated region
  $region2: #{tile.18} parent=0 // pred_check
    _
  $region3: #{tile.18} parent=0 // pred_check_branch
    %3 = sbr.rel (0) target = $region5
  $region4: #{tile.18} parent=0 // pred_region
    _
  $region5: #{tile.18} parent=0 // pred_fallthru
    _
  %v4 = vld [vmem:[%s0] ss:$0 sm:$0xff]
  %5 = vst [vmem:[%s1] sm:$0xff] %v4
  %s6 = scalar_lea.vmem %s1, 8
  %7 = vst [vmem:[%s6] sm:$0xff] %v4
  %s8 = scalar_lea.vmem %s1, 16
  %9 = vst [vmem:[%s8] sm:$0xff] %v4
  %s10 = scalar_lea.vmem %s1, 24
  %11 = vst [vmem:[%s10] sm:$0xff] %v4

// kernel: tile.19
$region0: #{tile.19}
  %s0 = inlined_call_operand.vmem [shape: f32[32,2], index: 0, kind: input, shape index: {}]
  %s1 = inlined_call_operand.vmem [shape: f32[1,64], index: 1, kind: output, shape index: {}]
  $region1: #{tile.19} parent=0
    #allocation0 [shape = 'u8[4096]{0}', space=vmem, size = 0x1000, scoped, tag = 'scoped mem for output reshape']
    %v2 = vld [vmem:[%s0] sm:$0x1]
    %vm3 = vcmask 15360
    %4 = vst.msk [vmem:[#allocation0] sm:$0x1] %vm3, %v2
    %s5 = scalar_lea.vmem %s0, 31
    %v6 = vld [vmem:[%s5] sm:$0x1]
    %7 = vrot.lane.b32.xlu0 %v6, 62
    %v8 = vpop.permute.xlu0 %7
    %vm9 = vcmask 523760
    %10 = vst.msk [vmem:[#allocation0] sm:$0x1] %vm9, %v8
    %s11 = scalar_lea.vmem %s0, 30
    %v12 = vld [vmem:[%s11] sm:$0x1]
    %13 = vrot.lane.b32.xlu0 %v12, 60
    %v14 = vpop.permute.xlu0 %13
    %vm15 = vcmask 507360
    %16 = vst.msk [vmem:[#allocation0] sm:$0x1] %vm15, %v14
    %s17 = scalar_lea.vmem %s0, 29
    %v18 = vld [vmem:[%s17] sm:$0x1]
    %19 = vrot.lane.b32.xlu0 %v18, 58
    %v20 = vpop.permute.xlu0 %19
    %vm21 = vcmask 490960
    %22 = vst.msk [vmem:[#allocation0] sm:$0x1] %vm21, %v20
    %s23 = scalar_lea.vmem %s0, 28
    %v24 = vld [vmem:[%s23] sm:$0x1]
    %25 = vrot.lane.b32.xlu0 %v24, 56
    %v26 = vpop.permute.xlu0 %25
    %vm27 = vcmask 474560
    %28 = vst.msk [vmem:[#allocation0] sm:$0x1] %vm27, %v26
    %s29 = scalar_lea.vmem %s0, 27
    %v30 = vld [vmem:[%s29] sm:$0x1]
    %31 = vrot.lane.b32.xlu0 %v30, 54
    %v32 = vpop.permute.xlu0 %31
    %vm33 = vcmask 458160
    %34 = vst.msk [vmem:[#allocation0] sm:$0x1] %vm33, %v32
    %s35 = scalar_lea.vmem %s0, 26
    %v36 = vld [vmem:[%s35] sm:$0x1]
    %37 = vrot.lane.b32.xlu0 %v36, 52
    %v38 = vpop.permute.xlu0 %37
    %vm39 = vcmask 441760
    %40 = vst.msk [vmem:[#allocation0] sm:$0x1] %vm39, %v38
    %s41 = scalar_lea.vmem %s0, 25
    %v42 = vld [vmem:[%s41] sm:$0x1]
    %43 = vrot.lane.b32.xlu0 %v42, 50
    %v44 = vpop.permute.xlu0 %43
    %vm45 = vcmask 425360
    %46 = vst.msk [vmem:[#allocation0] sm:$0x1] %vm45, %v44
    %s47 = scalar_lea.vmem %s0, 24
    %v48 = vld [vmem:[%s47] sm:$0x1]
    %49 = vrot.lane.b32.xlu0 %v48, 48
    %v50 = vpop.permute.xlu0 %49
    %vm51 = vcmask 408960
    %52 = vst.msk [vmem:[#allocation0] sm:$0x1] %vm51, %v50
    %s53 = scalar_lea.vmem %s0, 23
    %v54 = vld [vmem:[%s53] sm:$0x1]
    %55 = vrot.lane.b32.xlu0 %v54, 46
    %v56 = vpop.permute.xlu0 %55
    %vm57 = vcmask 392560
    %58 = vst.msk [vmem:[#allocation0] sm:$0x1] %vm57, %v56
    %s59 = scalar_lea.vmem %s0, 22
    %v60 = vld [vmem:[%s59] sm:$0x1]
    %61 = vrot.lane.b32.xlu0 %v60, 44
    %v62 = vpop.permute.xlu0 %61
    %vm63 = vcmask 376160
    %64 = vst.msk [vmem:[#allocation0] sm:$0x1] %vm63, %v62
    %s65 = scalar_lea.vmem %s0, 21
    %v66 = vld [vmem:[%s65] sm:$0x1]
    %67 = vrot.lane.b32.xlu0 %v66, 42
    %v68 = vpop.permute.xlu0 %67
    %vm69 = vcmask 359760
    %70 = vst.msk [vmem:[#allocation0] sm:$0x1] %vm69, %v68
    %s71 = scalar_lea.vmem %s0, 20
    %v72 = vld [vmem:[%s71] sm:$0x1]
    %73 = vrot.lane.b32.xlu0 %v72, 40
    %v74 = vpop.permute.xlu0 %73
    %vm75 = vcmask 343360
    %76 = vst.msk [vmem:[#allocation0] sm:$0x1] %vm75, %v74
    %s77 = scalar_lea.vmem %s0, 19
    %v78 = vld [vmem:[%s77] sm:$0x1]
    %79 = vrot.lane.b32.xlu0 %v78, 38
    %v80 = vpop.permute.xlu0 %79
    %vm81 = vcmask 326960
    %82 = vst.msk [vmem:[#allocation0] sm:$0x1] %vm81, %v80
    %s83 = scalar_lea.vmem %s0, 18
    %v84 = vld [vmem:[%s83] sm:$0x1]
    %85 = vrot.lane.b32.xlu0 %v84, 36
    %v86 = vpop.permute.xlu0 %85
    %vm87 = vcmask 310560
    %88 = vst.msk [vmem:[#allocation0] sm:$0x1] %vm87, %v86
    %s89 = scalar_lea.vmem %s0, 17
    %v90 = vld [vmem:[%s89] sm:$0x1]
    %91 = vrot.lane.b32.xlu0 %v90, 34
    %v92 = vpop.permute.xlu0 %91
    %vm93 = vcmask 294160
    %94 = vst.msk [vmem:[#allocation0] sm:$0x1] %vm93, %v92
    %s95 = scalar_lea.vmem %s0, 16
    %v96 = vld [vmem:[%s95] sm:$0x1]
    %97 = vrot.lane.b32.xlu0 %v96, 32
    %v98 = vpop.permute.xlu0 %97
    %vm99 = vcmask 277760
    %100 = vst.msk [vmem:[#allocation0] sm:$0x1] %vm99, %v98
    %s101 = scalar_lea.vmem %s0, 15
    %v102 = vld [vmem:[%s101] sm:$0x1]
    %103 = vrot.lane.b32.xlu0 %v102, 30
    %v104 = vpop.permute.xlu0 %103
    %vm105 = vcmask 261360
    %106 = vst.msk [vmem:[#allocation0] sm:$0x1] %vm105, %v104
    %s107 = scalar_lea.vmem %s0, 14
    %v108 = vld [vmem:[%s107] sm:$0x1]
    %109 = vrot.lane.b32.xlu0 %v108, 28
    %v110 = vpop.permute.xlu0 %109
    %vm111 = vcmask 244960
    %112 = vst.msk [vmem:[#allocation0] sm:$0x1] %vm111, %v110
    %s113 = scalar_lea.vmem %s0, 13
    %v114 = vld [vmem:[%s113] sm:$0x1]
    %115 = vrot.lane.b32.xlu0 %v114, 26
    %v116 = vpop.permute.xlu0 %115
    %vm117 = vcmask 228560
    %118 = vst.msk [vmem:[#allocation0] sm:$0x1] %vm117, %v116
    %s119 = scalar_lea.vmem %s0, 12
    %v120 = vld [vmem:[%s119] sm:$0x1]
    %121 = vrot.lane.b32.xlu0 %v120, 24
    %v122 = vpop.permute.xlu0 %121
    %vm123 = vcmask 212160
    %124 = vst.msk [vmem:[#allocation0] sm:$0x1] %vm123, %v122
    %s125 = scalar_lea.vmem %s0, 11
    %v126 = vld [vmem:[%s125] sm:$0x1]
    %127 = vrot.lane.b32.xlu0 %v126, 22
    %v128 = vpop.permute.xlu0 %127
    %vm129 = vcmask 195760
    %130 = vst.msk [vmem:[#allocation0] sm:$0x1] %vm129, %v128
    %s131 = scalar_lea.vmem %s0, 10
    %v132 = vld [vmem:[%s131] sm:$0x1]
    %133 = vrot.lane.b32.xlu0 %v132, 20
    %v134 = vpop.permute.xlu0 %133
    %vm135 = vcmask 179360
    %136 = vst.msk [vmem:[#allocation0] sm:$0x1] %vm135, %v134
    %s137 = scalar_lea.vmem %s0, 9
    %v138 = vld [vmem:[%s137] sm:$0x1]
    %139 = vrot.lane.b32.xlu0 %v138, 18
    %v140 = vpop.permute.xlu0 %139
    %vm141 = vcmask 162960
    %142 = vst.msk [vmem:[#allocation0] sm:$0x1] %vm141, %v140
    %s143 = scalar_lea.vmem %s0, 8
    %v144 = vld [vmem:[%s143] sm:$0x1]
    %145 = vrot.lane.b32.xlu0 %v144, 16
    %v146 = vpop.permute.xlu0 %145
    %vm147 = vcmask 146560
    %148 = vst.msk [vmem:[#allocation0] sm:$0x1] %vm147, %v146
    %s149 = scalar_lea.vmem %s0, 7
    %v150 = vld [vmem:[%s149] sm:$0x1]
    %151 = vrot.lane.b32.xlu0 %v150, 14
    %v152 = vpop.permute.xlu0 %151
    %vm153 = vcmask 130160
    %154 = vst.msk [vmem:[#allocation0] sm:$0x1] %vm153, %v152
    %s155 = scalar_lea.vmem %s0, 6
    %v156 = vld [vmem:[%s155] sm:$0x1]
    %157 = vrot.lane.b32.xlu0 %v156, 12
    %v158 = vpop.permute.xlu0 %157
    %vm159 = vcmask 113760
    %160 = vst.msk [vmem:[#allocation0] sm:$0x1] %vm159, %v158
    %s161 = scalar_lea.vmem %s0, 5
    %v162 = vld [vmem:[%s161] sm:$0x1]
    %163 = vrot.lane.b32.xlu0 %v162, 10
    %v164 = vpop.permute.xlu0 %163
    %vm165 = vcmask 97360
    %166 = vst.msk [vmem:[#allocation0] sm:$0x1] %vm165, %v164
    %s167 = scalar_lea.vmem %s0, 4
    %v168 = vld [vmem:[%s167] sm:$0x1]
    %169 = vrot.lane.b32.xlu0 %v168, 8
    %v170 = vpop.permute.xlu0 %169
    %vm171 = vcmask 80960
    %172 = vst.msk [vmem:[#allocation0] sm:$0x1] %vm171, %v170
    %s173 = scalar_lea.vmem %s0, 3
    %v174 = vld [vmem:[%s173] sm:$0x1]
    %175 = vrot.lane.b32.xlu0 %v174, 6
    %v176 = vpop.permute.xlu0 %175
    %vm177 = vcmask 64560
    %178 = vst.msk [vmem:[#allocation0] sm:$0x1] %vm177, %v176
    %s179 = scalar_lea.vmem %s0, 2
    %v180 = vld [vmem:[%s179] sm:$0x1]
    %181 = vrot.lane.b32.xlu0 %v180, 4
    %v182 = vpop.permute.xlu0 %181
    %vm183 = vcmask 48160
    %184 = vst.msk [vmem:[#allocation0] sm:$0x1] %vm183, %v182
    %s185 = scalar_lea.vmem %s0, 1
    %v186 = vld [vmem:[%s185] sm:$0x1]
    %187 = vrot.lane.b32.xlu0 %v186, 2
    %v188 = vpop.permute.xlu0 %187
    %vm189 = vcmask 31760
    %190 = vst.msk [vmem:[#allocation0] sm:$0x1] %vm189, %v188
    %s192 = sshllo.u32 0, 1
    %v194 = vld [vmem:[#allocation0] sm:%s192]
    %s195 = sshllo.u32 0, 1
    %196 = vst [vmem:[%s1] sm:%s195] %v194

// kernel: dqnn_forward.1
$region0: #{dqnn_forward.1}
  #allocation0 [shape = 'u32[]', space=smem, size = 0x4, offset = 0x4, fixed_abs, tag = 'smem constant byte address 0x4 - core index']
  #allocation1 [shape = 'u32[144,128]{1,0:T(1,128)}', space=vmem, size = 0x12000, scoped, tag = 'internal scratch']
  %s0 = inlined_call_operand.vmem [shape: f32[1,128], index: 0, kind: input, shape index: {}]
  %s1 = inlined_call_operand.vmem [shape: bf16[128,512], index: 1, kind: input, shape index: {}]
  %s2 = inlined_call_operand.vmem [shape: bf16[512,64], index: 2, kind: input, shape index: {}]
  %s3 = inlined_call_operand.vmem [shape: f32[1,512], index: 3, kind: input, shape index: {}]
  %s4 = inlined_call_operand.vmem [shape: f32[1,64], index: 4, kind: input, shape index: {}]
  %s5 = inlined_call_operand.vmem [shape: f32[1,64], index: 5, kind: output, shape index: {}]
  %s6 = sld [smem:[#allocation0]]
  $region30: #{dqnn_forward.1} parent=0
    _
  %s8 = ssub.s32 1, %s6
  %s9 = scalar_select 0, %s8, %s6
  // Predicated region
  $region2: #{dqnn_forward.1} parent=0 // pred_check
    _
  $region3: #{dqnn_forward.1} parent=0 // pred_check_branch
    %11 = sbr.rel (0) target = $region5
  $region4: #{dqnn_forward.1} parent=0 // pred_region
    _
  $region5: #{dqnn_forward.1} parent=0 // pred_fallthru
    _
  // Predicated region
  $region6: #{dqnn_forward.1} parent=0 // pred_check
    _
  $region7: #{dqnn_forward.1} parent=0 // pred_check_branch
    %13 = sbr.rel (0) target = $region9
  $region8: #{dqnn_forward.1} parent=0 // pred_region
    _
  $region9: #{dqnn_forward.1} parent=0 // pred_fallthru
    _
  // Predicated region
  $region10: #{dqnn_forward.1} parent=0 // pred_check
    _
  $region11: #{dqnn_forward.1} parent=0 // pred_check_branch
    %15 = sbr.rel (0) target = $region13
  $region12: #{dqnn_forward.1} parent=0 // pred_region
    _
  $region13: #{dqnn_forward.1} parent=0 // pred_fallthru
    _
  // Predicated region
  $region14: #{dqnn_forward.1} parent=0 // pred_check
    _
  $region15: #{dqnn_forward.1} parent=0 // pred_check_branch
    %17 = sbr.rel (0) target = $region17
  $region16: #{dqnn_forward.1} parent=0 // pred_region
    _
  $region17: #{dqnn_forward.1} parent=0 // pred_fallthru
    _
  // Predicated region
  $region18: #{dqnn_forward.1} parent=0 // pred_check
    _
  $region19: #{dqnn_forward.1} parent=0 // pred_check_branch
    %19 = sbr.rel (0) target = $region21
  $region20: #{dqnn_forward.1} parent=0 // pred_region
    _
  $region21: #{dqnn_forward.1} parent=0 // pred_fallthru
    _
  %v21 = vld [vmem:[%s0] sm:$0x1]
  %v22 = vpack.c.bf16 %v21, %v21
  %v23 = vld [vmem:[%s1] sm:$0xff]
  %v24 = vld [vmem:[%s1 + $0x8] sm:$0xff]
  %v25 = vld [vmem:[%s1 + $0x10] sm:$0xff]
  %v26 = vld [vmem:[%s1 + $0x18] sm:$0xff]
  %v27 = vld [vmem:[%s1 + $0x20] sm:$0xff]
  %v28 = vld [vmem:[%s1 + $0x28] sm:$0xff]
  %v29 = vld [vmem:[%s1 + $0x30] sm:$0xff]
  %v30 = vld [vmem:[%s1 + $0x38] sm:$0xff]
  %v31 = vld [vmem:[%s1 + $0x40] sm:$0xff]
  %v32 = vld [vmem:[%s1 + $0x48] sm:$0xff]
  %v33 = vld [vmem:[%s1 + $0x50] sm:$0xff]
  %v34 = vld [vmem:[%s1 + $0x58] sm:$0xff]
  %v35 = vld [vmem:[%s1 + $0x60] sm:$0xff]
  %v36 = vld [vmem:[%s1 + $0x68] sm:$0xff]
  %v37 = vld [vmem:[%s1 + $0x70] sm:$0xff]
  %v38 = vld [vmem:[%s1 + $0x78] sm:$0xff]
  %v39 = vld [vmem:[%s1 + $0x80] sm:$0xff]
  %v40 = vld [vmem:[%s1 + $0x88] sm:$0xff]
  %v41 = vld [vmem:[%s1 + $0x90] sm:$0xff]
  %v42 = vld [vmem:[%s1 + $0x98] sm:$0xff]
  %v43 = vld [vmem:[%s1 + $0xa0] sm:$0xff]
  %v44 = vld [vmem:[%s1 + $0xa8] sm:$0xff]
  %v45 = vld [vmem:[%s1 + $0xb0] sm:$0xff]
  %v46 = vld [vmem:[%s1 + $0xb8] sm:$0xff]
  %v47 = vld [vmem:[%s1 + $0xc0] sm:$0xff]
  %v48 = vld [vmem:[%s1 + $0xc8] sm:$0xff]
  %v49 = vld [vmem:[%s1 + $0xd0] sm:$0xff]
  %v50 = vld [vmem:[%s1 + $0xd8] sm:$0xff]
  %v51 = vld [vmem:[%s1 + $0xe0] sm:$0xff]
  %v52 = vld [vmem:[%s1 + $0xe8] sm:$0xff]
  %v53 = vld [vmem:[%s1 + $0xf0] sm:$0xff]
  %v54 = vld [vmem:[%s1 + $0xf8] sm:$0xff]
  %v55 = vld [vmem:[%s3] sm:$0xf]
  %v88 = vunpack.c.l.b16 %v23
  %v89 = vunpack.c.h.b16 %v23
  %v90 = vunpack.c.l.b16 %v24
  %v91 = vunpack.c.h.b16 %v24
  %v92 = vunpack.c.l.b16 %v25
  %v93 = vunpack.c.h.b16 %v25
  %v94 = vunpack.c.l.b16 %v26
  %v95 = vunpack.c.h.b16 %v26
  %v96 = vunpack.c.l.b16 %v27
  %v97 = vunpack.c.h.b16 %v27
  %v98 = vunpack.c.l.b16 %v28
  %v99 = vunpack.c.h.b16 %v28
  %v100 = vunpack.c.l.b16 %v29
  %v101 = vunpack.c.h.b16 %v29
  %v102 = vunpack.c.l.b16 %v30
  %v103 = vunpack.c.h.b16 %v30
  %v104 = vunpack.c.l.b16 %v31
  %v105 = vunpack.c.h.b16 %v31
  %v106 = vunpack.c.l.b16 %v32
  %v107 = vunpack.c.h.b16 %v32
  %v108 = vunpack.c.l.b16 %v33
  %v109 = vunpack.c.h.b16 %v33
  %v110 = vunpack.c.l.b16 %v34
  %v111 = vunpack.c.h.b16 %v34
  %v112 = vunpack.c.l.b16 %v35
  %v113 = vunpack.c.h.b16 %v35
  %v114 = vunpack.c.l.b16 %v36
  %v115 = vunpack.c.h.b16 %v36
  %v116 = vunpack.c.l.b16 %v37
  %v117 = vunpack.c.h.b16 %v37
  %v118 = vunpack.c.l.b16 %v38
  %v119 = vunpack.c.h.b16 %v38
  %v120 = vunpack.c.l.b16 %v39
  %v121 = vunpack.c.h.b16 %v39
  %v122 = vunpack.c.l.b16 %v40
  %v123 = vunpack.c.h.b16 %v40
  %v124 = vunpack.c.l.b16 %v41
  %v125 = vunpack.c.h.b16 %v41
  %v126 = vunpack.c.l.b16 %v42
  %v127 = vunpack.c.h.b16 %v42
  %v128 = vunpack.c.l.b16 %v43
  %v129 = vunpack.c.h.b16 %v43
  %v130 = vunpack.c.l.b16 %v44
  %v131 = vunpack.c.h.b16 %v44
  %v132 = vunpack.c.l.b16 %v45
  %v133 = vunpack.c.h.b16 %v45
  %v134 = vunpack.c.l.b16 %v46
  %v135 = vunpack.c.h.b16 %v46
  %v136 = vunpack.c.l.b16 %v47
  %v137 = vunpack.c.h.b16 %v47
  %v138 = vunpack.c.l.b16 %v48
  %v139 = vunpack.c.h.b16 %v48
  %v140 = vunpack.c.l.b16 %v49
  %v141 = vunpack.c.h.b16 %v49
  %v142 = vunpack.c.l.b16 %v50
  %v143 = vunpack.c.h.b16 %v50
  %v144 = vunpack.c.l.b16 %v51
  %v145 = vunpack.c.h.b16 %v51
  %v146 = vunpack.c.l.b16 %v52
  %v147 = vunpack.c.h.b16 %v52
  %v148 = vunpack.c.l.b16 %v53
  %v149 = vunpack.c.h.b16 %v53
  %v150 = vunpack.c.l.b16 %v54
  %v151 = vunpack.c.h.b16 %v54
  %v152 = vpack.c.b16 %v92, %v88
  %v153 = vpack.c.b16 %v93, %v89
  %v154 = vpack.c.b16 %v94, %v90
  %v155 = vpack.c.b16 %v95, %v91
  %v156 = vpack.c.b16 %v100, %v96
  %v157 = vpack.c.b16 %v101, %v97
  %v158 = vpack.c.b16 %v102, %v98
  %v159 = vpack.c.b16 %v103, %v99
  %v160 = vpack.c.b16 %v108, %v104
  %v161 = vpack.c.b16 %v109, %v105
  %v162 = vpack.c.b16 %v110, %v106
  %v163 = vpack.c.b16 %v111, %v107
  %v164 = vpack.c.b16 %v116, %v112
  %v165 = vpack.c.b16 %v117, %v113
  %v166 = vpack.c.b16 %v118, %v114
  %v167 = vpack.c.b16 %v119, %v115
  %v168 = vpack.c.b16 %v124, %v120
  %v169 = vpack.c.b16 %v125, %v121
  %v170 = vpack.c.b16 %v126, %v122
  %v171 = vpack.c.b16 %v127, %v123
  %v172 = vpack.c.b16 %v132, %v128
  %v173 = vpack.c.b16 %v133, %v129
  %v174 = vpack.c.b16 %v134, %v130
  %v175 = vpack.c.b16 %v135, %v131
  %v176 = vpack.c.b16 %v140, %v136
  %v177 = vpack.c.b16 %v141, %v137
  %v178 = vpack.c.b16 %v142, %v138
  %v179 = vpack.c.b16 %v143, %v139
  %v180 = vpack.c.b16 %v148, %v144
  %v181 = vpack.c.b16 %v149, %v145
  %v182 = vpack.c.b16 %v150, %v146
  %v183 = vpack.c.b16 %v151, %v147
  %v217 = vlaneseq
  %v218 = vshrl.u32 %v217, 7
  %v219 = vsub.s32 0, %v218
  %v220 = vrot.slane %v55, %v219
  %v221 = vlaneseq
  %v222 = vshrl.u32 %v221, 7
  %v223 = vsub.s32 1, %v222
  %v224 = vrot.slane %v55, %v223
  %v225 = vlaneseq
  %v226 = vshrl.u32 %v225, 7
  %v227 = vsub.s32 2, %v226
  %v228 = vrot.slane %v55, %v227
  %v229 = vlaneseq
  %v230 = vshrl.u32 %v229, 7
  %v231 = vsub.s32 3, %v230
  %v232 = vrot.slane %v55, %v231
  %237 = vmatprep.subr.bf16.mxu0 %v153
  %238 = vmatpush1.bf16.msra.mxu0 %v152
  %239 = vmatprep.subr.bf16.mxu0 %v157
  %240 = vmatpush1.bf16.msra.mxu0 %v156
  %241 = vmatprep.subr.bf16.mxu0 %v161
  %242 = vmatpush1.bf16.msra.mxu0 %v160
  %243 = vmatprep.subr.bf16.mxu0 %v165
  %244 = vmatpush1.bf16.msra.mxu0 %v164
  %245 = vmatprep.subr.bf16.mxu0 %v169
  %246 = vmatpush1.bf16.msra.mxu0 %v168
  %247 = vmatprep.subr.bf16.mxu0 %v173
  %248 = vmatpush1.bf16.msra.mxu0 %v172
  %249 = vmatprep.subr.bf16.mxu0 %v177
  %250 = vmatpush1.bf16.msra.mxu0 %v176
  %251 = vmatprep.subr.bf16.mxu0 %v181
  %252 = vmatpush1.bf16.msra.mxu0 %v180
  %253 = vmatprep.subr.bf16.mxu0 0
  %254 = vmatpush1.bf16.msra.mxu0 0
  %255 = vmatprep.subr.bf16.mxu0 0
  %256 = vmatpush1.bf16.msra.mxu0 0
  %257 = vmatprep.subr.bf16.mxu0 0
  %258 = vmatpush1.bf16.msra.mxu0 0
  %259 = vmatprep.subr.bf16.mxu0 0
  %260 = vmatpush1.bf16.msra.mxu0 0
  %261 = vmatprep.subr.bf16.mxu0 0
  %262 = vmatpush1.bf16.msra.mxu0 0
  %263 = vmatprep.subr.bf16.mxu0 0
  %264 = vmatpush1.bf16.msra.mxu0 0
  %265 = vmatprep.subr.bf16.mxu0 0
  %266 = vmatpush1.bf16.msra.mxu0 0
  %267 = vmatprep.subr.bf16.mxu0 0
  %268 = vmatpush1.bf16.msra.mxu0 0
  %269 = vmatprep.mubr.bf16.mxu0 0
  %270 = vmatmul.mubr.bf16.gmra.mrb[0].mxu0 %v22
  %v271 = vpop.f32.mrb[0].mxu0
  %v272 = vadd.f32 %v220, %v271
  %v273 = vpop.f32.mrb[0].mxu0
  %v274 = vadd.f32 %v224, %v273
  %v275 = vpop.f32.mrb[0].mxu0
  %v276 = vpop.f32.mrb[0].mxu0
  %277 = vdwg.mxu0
  %278 = vmatprep.subr.bf16.mxu0 %v155
  %279 = vmatpush1.bf16.msra.mxu0 %v154
  %280 = vmatprep.subr.bf16.mxu0 %v159
  %281 = vmatpush1.bf16.msra.mxu0 %v158
  %282 = vmatprep.subr.bf16.mxu0 %v163
  %283 = vmatpush1.bf16.msra.mxu0 %v162
  %284 = vmatprep.subr.bf16.mxu0 %v167
  %285 = vmatpush1.bf16.msra.mxu0 %v166
  %286 = vmatprep.subr.bf16.mxu0 %v171
  %287 = vmatpush1.bf16.msra.mxu0 %v170
  %288 = vmatprep.subr.bf16.mxu0 %v175
  %289 = vmatpush1.bf16.msra.mxu0 %v174
  %290 = vmatprep.subr.bf16.mxu0 %v179
  %291 = vmatpush1.bf16.msra.mxu0 %v178
  %292 = vmatprep.subr.bf16.mxu0 %v183
  %293 = vmatpush1.bf16.msra.mxu0 %v182
  %294 = vmatprep.subr.bf16.mxu0 0
  %295 = vmatpush1.bf16.msra.mxu0 0
  %296 = vmatprep.subr.bf16.mxu0 0
  %297 = vmatpush1.bf16.msra.mxu0 0
  %298 = vmatprep.subr.bf16.mxu0 0
  %299 = vmatpush1.bf16.msra.mxu0 0
  %300 = vmatprep.subr.bf16.mxu0 0
  %301 = vmatpush1.bf16.msra.mxu0 0
  %302 = vmatprep.subr.bf16.mxu0 0
  %303 = vmatpush1.bf16.msra.mxu0 0
  %304 = vmatprep.subr.bf16.mxu0 0
  %305 = vmatpush1.bf16.msra.mxu0 0
  %306 = vmatprep.subr.bf16.mxu0 0
  %307 = vmatpush1.bf16.msra.mxu0 0
  %308 = vmatprep.subr.bf16.mxu0 0
  %309 = vmatpush1.bf16.msra.mxu0 0
  %310 = vmatprep.mubr.bf16.mxu0 0
  %311 = vmatmul.mubr.bf16.gmra.mrb[0].mxu0 %v22
  %v312 = vpop.f32.mrb[0].mxu0
  %v313 = vadd.f32 %v228, %v312
  %v314 = vpop.f32.mrb[0].mxu0
  %v315 = vadd.f32 %v232, %v314
  %v316 = vpop.f32.mrb[0].mxu0
  %v317 = vpop.f32.mrb[0].mxu0
  %318 = vdwg.mxu0
  %v319 = vmax.f32 %v272, 0.0
  %v320 = vmax.f32 %v274, 0.0
  %v321 = vmax.f32 %v313, 0.0
  %v322 = vmax.f32 %v315, 0.0
  %v323 = vpack.c.bf16 %v319, %v319
  %v324 = vpack.c.bf16 %v320, %v320
  %v325 = vpack.c.bf16 %v321, %v321
  %v326 = vpack.c.bf16 %v322, %v322
  %v327 = vld [vmem:[%s2] sm:$0xf]
  %v328 = vld [vmem:[%s2 + $0x4] sm:$0xf]
  %v329 = vld [vmem:[%s2 + $0x8] sm:$0xf]
  %v330 = vld [vmem:[%s2 + $0xc] sm:$0xf]
  %v331 = vld [vmem:[%s2 + $0x10] sm:$0xf]
  %v332 = vld [vmem:[%s2 + $0x14] sm:$0xf]
  %v333 = vld [vmem:[%s2 + $0x18] sm:$0xf]
  %v334 = vld [vmem:[%s2 + $0x1c] sm:$0xf]
  %v335 = vld [vmem:[%s2 + $0x20] sm:$0xf]
  %v336 = vld [vmem:[%s2 + $0x24] sm:$0xf]
  %v337 = vld [vmem:[%s2 + $0x28] sm:$0xf]
  %v338 = vld [vmem:[%s2 + $0x2c] sm:$0xf]
  %v339 = vld [vmem:[%s2 + $0x30] sm:$0xf]
  %v340 = vld [vmem:[%s2 + $0x34] sm:$0xf]
  %v341 = vld [vmem:[%s2 + $0x38] sm:$0xf]
  %v342 = vld [vmem:[%s2 + $0x3c] sm:$0xf]
  %v343 = vld [vmem:[%s2 + $0x40] sm:$0xf]
  %v344 = vld [vmem:[%s2 + $0x44] sm:$0xf]
  %v345 = vld [vmem:[%s2 + $0x48] sm:$0xf]
  %v346 = vld [vmem:[%s2 + $0x4c] sm:$0xf]
  %v347 = vld [vmem:[%s2 + $0x50] sm:$0xf]
  %v348 = vld [vmem:[%s2 + $0x54] sm:$0xf]
  %v349 = vld [vmem:[%s2 + $0x58] sm:$0xf]
  %v350 = vld [vmem:[%s2 + $0x5c] sm:$0xf]
  %v351 = vld [vmem:[%s2 + $0x60] sm:$0xf]
  %v352 = vld [vmem:[%s2 + $0x64] sm:$0xf]
  %v353 = vld [vmem:[%s2 + $0x68] sm:$0xf]
  %v354 = vld [vmem:[%s2 + $0x6c] sm:$0xf]
  %v355 = vld [vmem:[%s2 + $0x70] sm:$0xf]
  %v356 = vld [vmem:[%s2 + $0x74] sm:$0xf]
  %v357 = vld [vmem:[%s2 + $0x78] sm:$0xf]
  %v358 = vld [vmem:[%s2 + $0x7c] sm:$0xf]
  %v359 = vld [vmem:[%s2 + $0x80] sm:$0xf]
  %v360 = vld [vmem:[%s2 + $0x84] sm:$0xf]
  %v361 = vld [vmem:[%s2 + $0x88] sm:$0xf]
  %v362 = vld [vmem:[%s2 + $0x8c] sm:$0xf]
  %v363 = vld [vmem:[%s2 + $0x90] sm:$0xf]
  %v364 = vld [vmem:[%s2 + $0x94] sm:$0xf]
  %v365 = vld [vmem:[%s2 + $0x98] sm:$0xf]
  %v366 = vld [vmem:[%s2 + $0x9c] sm:$0xf]
  %v367 = vld [vmem:[%s2 + $0xa0] sm:$0xf]
  %v368 = vld [vmem:[%s2 + $0xa4] sm:$0xf]
  %v369 = vld [vmem:[%s2 + $0xa8] sm:$0xf]
  %v370 = vld [vmem:[%s2 + $0xac] sm:$0xf]
  %v371 = vld [vmem:[%s2 + $0xb0] sm:$0xf]
  %v372 = vld [vmem:[%s2 + $0xb4] sm:$0xf]
  %v373 = vld [vmem:[%s2 + $0xb8] sm:$0xf]
  %v374 = vld [vmem:[%s2 + $0xbc] sm:$0xf]
  %v375 = vld [vmem:[%s2 + $0xc0] sm:$0xf]
  %v376 = vld [vmem:[%s2 + $0xc4] sm:$0xf]
  %v377 = vld [vmem:[%s2 + $0xc8] sm:$0xf]
  %v378 = vld [vmem:[%s2 + $0xcc] sm:$0xf]
  %v379 = vld [vmem:[%s2 + $0xd0] sm:$0xf]
  %v380 = vld [vmem:[%s2 + $0xd4] sm:$0xf]
  %v381 = vld [vmem:[%s2 + $0xd8] sm:$0xf]
  %v382 = vld [vmem:[%s2 + $0xdc] sm:$0xf]
  %v383 = vld [vmem:[%s2 + $0xe0] sm:$0xf]
  %v384 = vld [vmem:[%s2 + $0xe4] sm:$0xf]
  %v385 = vld [vmem:[%s2 + $0xe8] sm:$0xf]
  %v386 = vld [vmem:[%s2 + $0xec] sm:$0xf]
  %v387 = vld [vmem:[%s2 + $0xf0] sm:$0xf]
  %v388 = vld [vmem:[%s2 + $0xf4] sm:$0xf]
  %v389 = vld [vmem:[%s2 + $0xf8] sm:$0xf]
  %v390 = vld [vmem:[%s2 + $0xfc] sm:$0xf]
  %v391 = vld [vmem:[%s4] sm:$0x1]
  %v456 = vunpack.c.l.b16 %v327
  %v457 = vunpack.c.l.b16 %v328
  %v458 = vunpack.c.l.b16 %v329
  %v459 = vunpack.c.l.b16 %v330
  %v460 = vunpack.c.l.b16 %v331
  %v461 = vunpack.c.l.b16 %v332
  %v462 = vunpack.c.l.b16 %v333
  %v463 = vunpack.c.l.b16 %v334
  %v464 = vunpack.c.l.b16 %v335
  %v465 = vunpack.c.l.b16 %v336
  %v466 = vunpack.c.l.b16 %v337
  %v467 = vunpack.c.l.b16 %v338
  %v468 = vunpack.c.l.b16 %v339
  %v469 = vunpack.c.l.b16 %v340
  %v470 = vunpack.c.l.b16 %v341
  %v471 = vunpack.c.l.b16 %v342
  %v472 = vunpack.c.l.b16 %v343
  %v473 = vunpack.c.l.b16 %v344
  %v474 = vunpack.c.l.b16 %v345
  %v475 = vunpack.c.l.b16 %v346
  %v476 = vunpack.c.l.b16 %v347
  %v477 = vunpack.c.l.b16 %v348
  %v478 = vunpack.c.l.b16 %v349
  %v479 = vunpack.c.l.b16 %v350
  %v480 = vunpack.c.l.b16 %v351
  %v481 = vunpack.c.l.b16 %v352
  %v482 = vunpack.c.l.b16 %v353
  %v483 = vunpack.c.l.b16 %v354
  %v484 = vunpack.c.l.b16 %v355
  %v485 = vunpack.c.l.b16 %v356
  %v486 = vunpack.c.l.b16 %v357
  %v487 = vunpack.c.l.b16 %v358
  %v488 = vunpack.c.l.b16 %v359
  %v489 = vunpack.c.l.b16 %v360
  %v490 = vunpack.c.l.b16 %v361
  %v491 = vunpack.c.l.b16 %v362
  %v492 = vunpack.c.l.b16 %v363
  %v493 = vunpack.c.l.b16 %v364
  %v494 = vunpack.c.l.b16 %v365
  %v495 = vunpack.c.l.b16 %v366
  %v496 = vunpack.c.l.b16 %v367
  %v497 = vunpack.c.l.b16 %v368
  %v498 = vunpack.c.l.b16 %v369
  %v499 = vunpack.c.l.b16 %v370
  %v500 = vunpack.c.l.b16 %v371
  %v501 = vunpack.c.l.b16 %v372
  %v502 = vunpack.c.l.b16 %v373
  %v503 = vunpack.c.l.b16 %v374
  %v504 = vunpack.c.l.b16 %v375
  %v505 = vunpack.c.l.b16 %v376
  %v506 = vunpack.c.l.b16 %v377
  %v507 = vunpack.c.l.b16 %v378
  %v508 = vunpack.c.l.b16 %v379
  %v509 = vunpack.c.l.b16 %v380
  %v510 = vunpack.c.l.b16 %v381
  %v511 = vunpack.c.l.b16 %v382
  %v512 = vunpack.c.l.b16 %v383
  %v513 = vunpack.c.l.b16 %v384
  %v514 = vunpack.c.l.b16 %v385
  %v515 = vunpack.c.l.b16 %v386
  %v516 = vunpack.c.l.b16 %v387
  %v517 = vunpack.c.l.b16 %v388
  %v518 = vunpack.c.l.b16 %v389
  %v519 = vunpack.c.l.b16 %v390
  %v520 = vpack.c.b16 %v457, %v456
  %v521 = vpack.c.b16 %v459, %v458
  %v522 = vpack.c.b16 %v461, %v460
  %v523 = vpack.c.b16 %v463, %v462
  %v524 = vpack.c.b16 %v465, %v464
  %v525 = vpack.c.b16 %v467, %v466
  %v526 = vpack.c.b16 %v469, %v468
  %v527 = vpack.c.b16 %v471, %v470
  %v528 = vpack.c.b16 %v473, %v472
  %v529 = vpack.c.b16 %v475, %v474
  %v530 = vpack.c.b16 %v477, %v476
  %v531 = vpack.c.b16 %v479, %v478
  %v532 = vpack.c.b16 %v481, %v480
  %v533 = vpack.c.b16 %v483, %v482
  %v534 = vpack.c.b16 %v485, %v484
  %v535 = vpack.c.b16 %v487, %v486
  %v536 = vpack.c.b16 %v489, %v488
  %v537 = vpack.c.b16 %v491, %v490
  %v538 = vpack.c.b16 %v493, %v492
  %v539 = vpack.c.b16 %v495, %v494
  %v540 = vpack.c.b16 %v497, %v496
  %v541 = vpack.c.b16 %v499, %v498
  %v542 = vpack.c.b16 %v501, %v500
  %v543 = vpack.c.b16 %v503, %v502
  %v544 = vpack.c.b16 %v505, %v504
  %v545 = vpack.c.b16 %v507, %v506
  %v546 = vpack.c.b16 %v509, %v508
  %v547 = vpack.c.b16 %v511, %v510
  %v548 = vpack.c.b16 %v513, %v512
  %v549 = vpack.c.b16 %v515, %v514
  %v550 = vpack.c.b16 %v517, %v516
  %v551 = vpack.c.b16 %v519, %v518
  %584 = vmatprep.subr.bf16.mxu0 0
  %585 = vmatpush1.bf16.msra.mxu0 %v520
  %586 = vmatprep.subr.bf16.mxu0 0
  %587 = vmatpush1.bf16.msra.mxu0 %v521
  %588 = vmatprep.subr.bf16.mxu0 0
  %589 = vmatpush1.bf16.msra.mxu0 %v522
  %590 = vmatprep.subr.bf16.mxu0 0
  %591 = vmatpush1.bf16.msra.mxu0 %v523
  %592 = vmatprep.subr.bf16.mxu0 0
  %593 = vmatpush1.bf16.msra.mxu0 %v524
  %594 = vmatprep.subr.bf16.mxu0 0
  %595 = vmatpush1.bf16.msra.mxu0 %v525
  %596 = vmatprep.subr.bf16.mxu0 0
  %597 = vmatpush1.bf16.msra.mxu0 %v526
  %598 = vmatprep.subr.bf16.mxu0 0
  %599 = vmatpush1.bf16.msra.mxu0 %v527
  %600 = vmatprep.subr.bf16.mxu0 0
  %601 = vmatpush1.bf16.msra.mxu0 %v528
  %602 = vmatprep.subr.bf16.mxu0 0
  %603 = vmatpush1.bf16.msra.mxu0 %v529
  %604 = vmatprep.subr.bf16.mxu0 0
  %605 = vmatpush1.bf16.msra.mxu0 %v530
  %606 = vmatprep.subr.bf16.mxu0 0
  %607 = vmatpush1.bf16.msra.mxu0 %v531
  %608 = vmatprep.subr.bf16.mxu0 0
  %609 = vmatpush1.bf16.msra.mxu0 %v532
  %610 = vmatprep.subr.bf16.mxu0 0
  %611 = vmatpush1.bf16.msra.mxu0 %v533
  %612 = vmatprep.subr.bf16.mxu0 0
  %613 = vmatpush1.bf16.msra.mxu0 %v534
  %614 = vmatprep.subr.bf16.mxu0 0
  %615 = vmatpush1.bf16.msra.mxu0 %v535
  %616 = vmatprep.mubr.bf16.mxu0 %v324
  %617 = vmatmul.mubr.bf16.gmra.mrb[0].mxu0 %v323
  %v618 = vpop.f32.mrb[0].mxu0
  %v619 = vadd.f32 %v391, %v618
  %v620 = vpop.f32.mrb[0].mxu0
  %v621 = vpop.f32.mrb[0].mxu0
  %v622 = vpop.f32.mrb[0].mxu0
  %623 = vdwg.mxu0
  %624 = vmatprep.subr.bf16.mxu0 0
  %625 = vmatpush1.bf16.msra.mxu0 %v536
  %626 = vmatprep.subr.bf16.mxu0 0
  %627 = vmatpush1.bf16.msra.mxu0 %v537
  %628 = vmatprep.subr.bf16.mxu0 0
  %629 = vmatpush1.bf16.msra.mxu0 %v538
  %630 = vmatprep.subr.bf16.mxu0 0
  %631 = vmatpush1.bf16.msra.mxu0 %v539
  %632 = vmatprep.subr.bf16.mxu0 0
  %633 = vmatpush1.bf16.msra.mxu0 %v540
  %634 = vmatprep.subr.bf16.mxu0 0
  %635 = vmatpush1.bf16.msra.mxu0 %v541
  %636 = vmatprep.subr.bf16.mxu0 0
  %637 = vmatpush1.bf16.msra.mxu0 %v542
  %638 = vmatprep.subr.bf16.mxu0 0
  %639 = vmatpush1.bf16.msra.mxu0 %v543
  %640 = vmatprep.subr.bf16.mxu0 0
  %641 = vmatpush1.bf16.msra.mxu0 %v544
  %642 = vmatprep.subr.bf16.mxu0 0
  %643 = vmatpush1.bf16.msra.mxu0 %v545
  %644 = vmatprep.subr.bf16.mxu0 0
  %645 = vmatpush1.bf16.msra.mxu0 %v546
  %646 = vmatprep.subr.bf16.mxu0 0
  %647 = vmatpush1.bf16.msra.mxu0 %v547
  %648 = vmatprep.subr.bf16.mxu0 0
  %649 = vmatpush1.bf16.msra.mxu0 %v548
  %650 = vmatprep.subr.bf16.mxu0 0
  %651 = vmatpush1.bf16.msra.mxu0 %v549
  %652 = vmatprep.subr.bf16.mxu0 0
  %653 = vmatpush1.bf16.msra.mxu0 %v550
  %654 = vmatprep.subr.bf16.mxu0 0
  %655 = vmatpush1.bf16.msra.mxu0 %v551
  %656 = vmatprep.mubr.bf16.mxu0 %v326
  %657 = vmatmul.mubr.bf16.gmra.mrb[0].mxu0 %v325
  %v658 = vpop.f32.mrb[0].mxu0
  %v659 = vadd.f32 %v619, %v658
  %v660 = vpop.f32.mrb[0].mxu0
  %v661 = vpop.f32.mrb[0].mxu0
  %v662 = vpop.f32.mrb[0].mxu0
  %663 = vdwg.mxu0
  %vm664 = vcmask 516096
  %665 = vst.msk [vmem:[%s5] sm:$0x1] %vm664, %v659
  // Predicated region
  $region22: #{dqnn_forward.1} parent=0 // pred_check
    _
  $region23: #{dqnn_forward.1} parent=0 // pred_check_branch
    %667 = sbr.rel (0) target = $region25
  $region24: #{dqnn_forward.1} parent=0 // pred_region
    _
  $region25: #{dqnn_forward.1} parent=0 // pred_fallthru
    _
  // Predicated region
  $region26: #{dqnn_forward.1} parent=0 // pred_check
    _
  $region27: #{dqnn_forward.1} parent=0 // pred_check_branch
    %669 = sbr.rel (0) target = $region29
  $region28: #{dqnn_forward.1} parent=0 // pred_region
    _
  $region29: #{dqnn_forward.1} parent=0 // pred_fallthru
    _

</llo_original>
